<compile_context>
chip_gen: v7x
topology: tpu7x:2x2x1
jax: 0.10.0
libtpu: 0.0.40
codegen_flags: <defaults>
</compile_context>

<pallas_src>
import functools
import math

import jax
import jax.numpy as jnp
from jax.experimental import pallas as pl
from jax.experimental.pallas import tpu as pltpu

_SQRT1_2 = 1.0 / math.sqrt(2.0)
_LN_EPS = 1e-12
_ACT_DTYPE = jnp.bfloat16          # HBM storage dtype for weights/activations


# -----------------------------------------------------------------------------
# Generation-aware configuration
# -----------------------------------------------------------------------------
def _detect_hw():
    """VMEM budget / tile caps per chip generation (v7x: 64 MiB VMEM, 2 TCs)."""
    vmem = 128 * 1024 * 1024
    try:
        vmem = int(pltpu.get_tpu_info().vmem_capacity_bytes)
    except Exception:  # conservative fallback if the query is unavailable
        pass
    if vmem <= 64 * 1024 * 1024:            # v7x-class
        return dict(vmem_limit=44 * 2**20, tm_cap=512, tn_cap=512,
                    tk_cap=512, split_rows=True)
    return dict(vmem_limit=96 * 2**20, tm_cap=1024, tn_cap=512,
                tk_cap=1024, split_rows=False)


_HW = _detect_hw()


def _mosaic_params(semantics):
    return pltpu.CompilerParams(dimension_semantics=semantics,
                                vmem_limit_bytes=_HW["vmem_limit"])


def _tile_for(dim, cap, align):
    """(tile, padded_dim): largest aligned divisor of dim <= cap; the full dim
    when it already fits; otherwise an aligned tile with zero padding (instead
    of the old silently-huge single block)."""
    if dim <= cap:
        return dim, dim
    start = cap - (cap % align)
    for t in range(start, align - 1, -align):
        if dim % t == 0:
            return t, dim
    tile = start
    padded = -(-dim // tile) * tile
    return tile, padded


def _row_tile(dim, cap):
    t, padded = _tile_for(dim, cap, 16)     # 16: bf16 sublane packing
    # v7x megacore: give full-row-N kernels >= 2 row blocks so both TCs work.
    if _HW["split_rows"] and padded // t < 2 and t % 32 == 0:
        t //= 2
    return t, padded


def _seq_tile(seq_len, cap):
    t = seq_len
    if seq_len > cap:
        for cand in range(cap - (cap % 16), 15, -16):
            if seq_len % cand == 0:
                t = cand
                break
        # TODO(synk): flash-style online-softmax KV tiling / padding for very
        # long, non-divisible sequence lengths (S >= ~1024).
    if _HW["split_rows"] and t == seq_len and seq_len % 32 == 0:
        t = seq_len // 2
    return t


def _heads_per_group(num_heads, head_dim, target_lanes=256):
    """Heads per group so one group spans ~target_lanes lanes (unmasked stores,
    good MXU fill on the QKV/output projections); always divides num_heads."""
    best = 1
    for g in range(1, num_heads + 1):
        if num_heads % g == 0 and g * head_dim <= max(target_lanes, head_dim):
            best = g
    return best


# -----------------------------------------------------------------------------
# Kernel A: tiled linear (matmul + bias [+ exact GELU])
# -----------------------------------------------------------------------------
def _linear_kernel(x_ref, w_ref, b_ref, o_ref, acc_ref, *, activation):
    @pl.when(pl.program_id(2) == 0)
    def _init():
        acc_ref[...] = jnp.zeros_like(acc_ref)

    acc_ref[...] += jnp.dot(x_ref[...], w_ref[...],
                            preferred_element_type=jnp.float32)

    @pl.when(pl.program_id(2) == pl.num_programs(2) - 1)
    def _finalize():
        y = acc_ref[...] + b_ref[...]
        if activation == "gelu":
            # exact GELU (matches torch.nn.functional.gelu default)
            y = 0.5 * y * (1.0 + jax.lax.erf(y * _SQRT1_2))
        o_ref[...] = y.astype(o_ref.dtype)


def linear(x, w, b, activation=None):
    """x:(M,K) bf16, w:(K,N) bf16, b:(N,) f32 -> (M,N) bf16."""
    M, K = x.shape
    N = w.shape[1]
    tm, Mp = _tile_for(M, _HW["tm_cap"], 16)
    tn, Np = _tile_for(N, _HW["tn_cap"], 128)
    tk, Kp = _tile_for(K, _HW["tk_cap"], 128)
    if (Mp, Kp) != (M, K):
        x = jnp.pad(x, ((0, Mp - M), (0, Kp - K)))
    if (Kp, Np) != (K, N):
        w = jnp.pad(w, ((0, Kp - K), (0, Np - N)))
    if Np != N:
        b = jnp.pad(b, (0, Np - N))
    # TODO(synk): on v5e, pl.Buffered(3) on the weight BlockSpec if profiling
    # shows exposed weight-stream DMA.
    out = pl.pallas_call(
        functools.partial(_linear_kernel, activation=activation),
        out_shape=jax.ShapeDtypeStruct((Mp, Np), _ACT_DTYPE),
        grid_spec=pltpu.PrefetchScalarGridSpec(
            num_scalar_prefetch=0,
            grid=(Mp // tm, Np // tn, Kp // tk),
            in_specs=[
                pl.BlockSpec((tm, tk), lambda i, j, k: (i, k)),
                pl.BlockSpec((tk, tn), lambda i, j, k: (k, j)),
                pl.BlockSpec((1, tn), lambda i, j, k: (0, j)),
            ],
            out_specs=pl.BlockSpec((tm, tn), lambda i, j, k: (i, j)),
            scratch_shapes=[pltpu.VMEM((tm, tn), jnp.float32)],
        ),
        compiler_params=_mosaic_params(("parallel", "parallel", "arbitrary")),
    )(x, w, b.reshape(1, Np))
    if (Mp, Np) != (M, N):
        out = out[:M, :N]
    return out


# -----------------------------------------------------------------------------
# Kernel B: fused QKV projection writing the head-grouped layout directly
# -----------------------------------------------------------------------------
def qkv_projection(x, wqkv_g, bqkv_g, batch, seq_len):
    """x:(B*S,H) bf16, wqkv_g:(3*nG,H,GDh) bf16 (scale folded into q part),
    bqkv_g:(3*nG,1,GDh) f32 -> (3, B, nG, S, GDh) bf16 (no XLA transpose)."""
    _, K = x.shape
    n_col, _, gdh = wqkv_g.shape
    ng = n_col // 3
    ts = _seq_tile(seq_len, _HW["tm_cap"])
    tk, Kp = _tile_for(K, _HW["tk_cap"], 128)
    if Kp != K:
        x = jnp.pad(x, ((0, 0), (0, Kp - K)))
        wqkv_g = jnp.pad(wqkv_g, ((0, 0), (0, Kp - K), (0, 0)))
    s_blocks = seq_len // ts
    grid = (batch * s_blocks, n_col, Kp // tk)
    return pl.pallas_call(
        functools.partial(_linear_kernel, activation=None),
        out_shape=jax.ShapeDtypeStruct((3, batch, ng, seq_len, gdh),
                                       _ACT_DTYPE),
        grid_spec=pltpu.PrefetchScalarGridSpec(
            num_scalar_prefetch=0,
            grid=grid,
            in_specs=[
                pl.BlockSpec((ts, tk), lambda i, j, k: (i, k)),
                pl.BlockSpec((None, tk, gdh), lambda i, j, k: (j, k, 0)),
                pl.BlockSpec((None, 1, gdh), lambda i, j, k: (j, 0, 0)),
            ],
            out_specs=pl.BlockSpec(
                (None, None, None, ts, gdh),
                lambda i, j, k: (j // ng, i // s_blocks, j % ng,
                                 i % s_blocks, 0)),
            scratch_shapes=[pltpu.VMEM((ts, gdh), jnp.float32)],
        ),
        compiler_params=_mosaic_params(("parallel", "parallel", "arbitrary")),
    )(x, wqkv_g, bqkv_g)


# -----------------------------------------------------------------------------
# Kernel C: attention + output projection + bias + residual + LayerNorm fused
# -----------------------------------------------------------------------------
def _attn_block_kernel(q_ref, k_ref, v_ref, bias_ref, wo_ref, bo_ref, res_ref,
                       g_ref, bt_ref, o_ref, acc_ref,
                       *, heads_per_group, head_dim, eps):
    @pl.when(pl.program_id(2) == 0)
    def _init():
        acc_ref[...] = jnp.zeros_like(acc_ref)

    # TODO(synk): add flash-style online-softmax KV tiling for S >= ~1024;
    # here the full (ts, S) score block per head is materialized.
    q_all = q_ref[...]                       # (ts, G*Dh) bf16
    k_all = k_ref[...]                       # (S,  G*Dh) bf16
    v_all = v_ref[...]                       # (S,  G*Dh) bf16
    bias = bias_ref[...]                     # (1, S) f32

    ctx_parts = []
    for g in range(heads_per_group):
        lo, hi = g * head_dim, (g + 1) * head_dim
        s = jax.lax.dot_general(q_all[:, lo:hi], k_all[:, lo:hi],
                                (((1,), (1,)), ((), ())),
                                preferred_element_type=jnp.float32)  # (ts, S)
        s = s + bias
        s = s - jnp.max(s, axis=-1, keepdims=True)
        p = jnp.exp(s)
        p = p * pl.reciprocal(jnp.sum(p, axis=-1, keepdims=True), approx=True)
        ctx_parts.append(jnp.dot(p.astype(_ACT_DTYPE), v_all[:, lo:hi],
                                 preferred_element_type=jnp.float32))
    ctx = (ctx_parts[0] if heads_per_group == 1
           else jnp.concatenate(ctx_parts, axis=1))                  # (ts, G*Dh)
    acc_ref[...] += jnp.dot(ctx.astype(_ACT_DTYPE), wo_ref[...],
                            preferred_element_type=jnp.float32)

    @pl.when(pl.program_id(2) == pl.num_programs(2) - 1)
    def _finalize():
        y = acc_ref[...] + bo_ref[...] + res_ref[...].astype(jnp.float32)
        mu = jnp.mean(y, axis=-1, keepdims=True)
        yc = y - mu
        var = jnp.mean(yc * yc, axis=-1, keepdims=True)
        o_ref[...] = (yc * jax.lax.rsqrt(var + eps) * g_ref[...]
                      + bt_ref[...]).astype(o_ref.dtype)


def attention_block(qkv, mask_bias, wo_g, bo, residual, gamma, beta, cfg,
                    eps=_LN_EPS):
    """softmax(q k^T + bias) v, output projection, bias + residual + LayerNorm
    in one kernel; head groups are the innermost contraction axis, so the
    per-head context never round-trips through HBM."""
    _, batch, ng, seq_len, gdh = qkv.shape
    hidden = residual.shape[-1]
    ts = _seq_tile(seq_len, _HW["tm_cap"])
    grid = (batch, seq_len // ts, ng)
    kernel = functools.partial(_attn_block_kernel,
                               heads_per_group=cfg["heads_per_group"],
                               head_dim=cfg["head_dim"], eps=eps)
    return pl.pallas_call(
        kernel,
        out_shape=jax.ShapeDtypeStruct((batch, seq_len, hidden), _ACT_DTYPE),
        grid_spec=pltpu.PrefetchScalarGridSpec(
            num_scalar_prefetch=0,
            grid=grid,
            in_specs=[
                pl.BlockSpec((None, None, None, ts, gdh),
                             lambda b, s, g: (0, b, g, s, 0)),
                pl.BlockSpec((None, None, None, seq_len, gdh),
                             lambda b, s, g: (1, b, g, 0, 0)),
                pl.BlockSpec((None, None, None, seq_len, gdh),
                             lambda b, s, g: (2, b, g, 0, 0)),
                pl.BlockSpec((None, 1, seq_len), lambda b, s, g: (b, 0, 0)),
                pl.BlockSpec((None, gdh, hidden), lambda b, s, g: (g, 0, 0)),
                pl.BlockSpec((1, hidden), lambda b, s, g: (0, 0)),
                pl.BlockSpec((None, ts, hidden), lambda b, s, g: (b, s, 0)),
                pl.BlockSpec((1, hidden), lambda b, s, g: (0, 0)),
                pl.BlockSpec((1, hidden), lambda b, s, g: (0, 0)),
            ],
            out_specs=pl.BlockSpec((None, ts, hidden),
                                   lambda b, s, g: (b, s, 0)),
            scratch_shapes=[pltpu.VMEM((ts, hidden), jnp.float32)],
        ),
        compiler_params=_mosaic_params(("parallel", "parallel", "arbitrary")),
    )(qkv, qkv, qkv, mask_bias, wo_g, bo.reshape(1, hidden), residual,
      gamma.reshape(1, hidden), beta.reshape(1, hidden))


# -----------------------------------------------------------------------------
# Kernel D: matmul + bias + residual + LayerNorm (+ optional fused detector)
# -----------------------------------------------------------------------------
def _mm_res_ln_kernel(x_ref, w_ref, b_ref, res_ref, g_ref, bt_ref,
                      o_ref, acc_ref, *, eps):
    @pl.when(pl.program_id(1) == 0)
    def _init():
        acc_ref[...] = jnp.zeros_like(acc_ref)

    acc_ref[...] += jnp.dot(x_ref[...], w_ref[...],
                            preferred_element_type=jnp.float32)

    @pl.when(pl.program_id(1) == pl.num_programs(1) - 1)
    def _finalize():
        y = acc_ref[...] + b_ref[...] + res_ref[...].astype(jnp.float32)
        mu = jnp.mean(y, axis=-1, keepdims=True)
        yc = y - mu
        var = jnp.mean(yc * yc, axis=-1, keepdims=True)
        o_ref[...] = (yc * jax.lax.rsqrt(var + eps) * g_ref[...]
                      + bt_ref[...]).astype(o_ref.dtype)


def _mm_res_ln_det_kernel(x_ref, w_ref, b_ref, res_ref, g_ref, bt_ref,
                          dw_ref, db_ref, o_ref, logit_ref, acc_ref, *, eps):
    @pl.when(pl.program_id(1) == 0)
    def _init():
        acc_ref[...] = jnp.zeros_like(acc_ref)

    acc_ref[...] += jnp.dot(x_ref[...], w_ref[...],
                            preferred_element_type=jnp.float32)

    @pl.when(pl.program_id(1) == pl.num_programs(1) - 1)
    def _finalize():
        y = acc_ref[...] + b_ref[...] + res_ref[...].astype(jnp.float32)
        mu = jnp.mean(y, axis=-1, keepdims=True)
        yc = y - mu
        var = jnp.mean(yc * yc, axis=-1, keepdims=True)
        out = yc * jax.lax.rsqrt(var + eps) * g_ref[...] + bt_ref[...]
        o_ref[...] = out.astype(o_ref.dtype)
        # detector head fused here: H -> 1 is a VPU multiply + row-reduce
        logit_ref[...] = (jnp.sum(out * dw_ref[...], axis=-1, keepdims=True)
                          + db_ref[...])


def matmul_residual_layernorm(x, w, b, residual, gamma, beta,
                              det_w=None, det_b=None, eps=_LN_EPS):
    """LayerNorm(x @ w + b + residual); if det_w/det_b are given, also returns
    the detector logits (M, 1) computed from the normalized rows."""
    M, K = x.shape
    N = w.shape[1]
    tm, Mp = _row_tile(M, _HW["tm_cap"])
    tk, Kp = _tile_for(K, _HW["tk_cap"], 128)
    if (Mp, Kp) != (M, K):
        x = jnp.pad(x, ((0, Mp - M), (0, Kp - K)))
    if Kp != K:
        w = jnp.pad(w, ((0, Kp - K), (0, 0)))
    if Mp != M:
        residual = jnp.pad(residual, ((0, Mp - M), (0, 0)))
    grid = (Mp // tm, Kp // tk)
    in_specs = [
        pl.BlockSpec((tm, tk), lambda i, k: (i, k)),
        pl.BlockSpec((tk, N), lambda i, k: (k, 0)),
        pl.BlockSpec((1, N), lambda i, k: (0, 0)),
        pl.BlockSpec((tm, N), lambda i, k: (i, 0)),
        pl.BlockSpec((1, N), lambda i, k: (0, 0)),
        pl.BlockSpec((1, N), lambda i, k: (0, 0)),
    ]
    args = [x, w, b.reshape(1, N), residual,
            gamma.reshape(1, N), beta.reshape(1, N)]
    scratch = [pltpu.VMEM((tm, N), jnp.float32)]
    cparams = _mosaic_params(("parallel", "arbitrary"))

    if det_w is None:
        out = pl.pallas_call(
            functools.partial(_mm_res_ln_kernel, eps=eps),
            out_shape=jax.ShapeDtypeStruct((Mp, N), _ACT_DTYPE),
            grid_spec=pltpu.PrefetchScalarGridSpec(
                num_scalar_prefetch=0, grid=grid, in_specs=in_specs,
                out_specs=pl.BlockSpec((tm, N), lambda i, k: (i, 0)),
                scratch_shapes=scratch),
            compiler_params=cparams,
        )(*args)
        return out[:M] if Mp != M else out

    in_specs = in_specs + [pl.BlockSpec((1, N), lambda i, k: (0, 0)),
                           pl.BlockSpec((1, 1), lambda i, k: (0, 0))]
    args = args + [det_w.reshape(1, N), det_b.reshape(1, 1)]
    out, logits = pl.pallas_call(
        functools.partial(_mm_res_ln_det_kernel, eps=eps),
        out_shape=(jax.ShapeDtypeStruct((Mp, N), _ACT_DTYPE),
                   jax.ShapeDtypeStruct((Mp, 1), jnp.float32)),
        grid_spec=pltpu.PrefetchScalarGridSpec(
            num_scalar_prefetch=0, grid=grid, in_specs=in_specs,
            out_specs=[pl.BlockSpec((tm, N), lambda i, k: (i, 0)),
                       pl.BlockSpec((tm, 1), lambda i, k: (i, 0))],
            scratch_shapes=scratch),
        compiler_params=cparams,
    )(*args)
    if Mp != M:
        out, logits = out[:M], logits[:M]
    return out, logits


# -----------------------------------------------------------------------------
# Kernel E: row-tiled LayerNorm (embeddings)
# -----------------------------------------------------------------------------
def _layernorm_kernel(x_ref, g_ref, b_ref, o_ref, *, eps):
    x = x_ref[...].astype(jnp.float32)
    mu = jnp.mean(x, axis=-1, keepdims=True)
    xc = x - mu
    var = jnp.mean(xc * xc, axis=-1, keepdims=True)
    o_ref[...] = (xc * jax.lax.rsqrt(var + eps) * g_ref[...]
                  + b_ref[...]).astype(o_ref.dtype)


def layernorm(x, gamma, beta, eps=_LN_EPS):
    M, H = x.shape
    tm, Mp = _row_tile(M, _HW["tm_cap"])
    if Mp != M:
        x = jnp.pad(x, ((0, Mp - M), (0, 0)))
    out = pl.pallas_call(
        functools.partial(_layernorm_kernel, eps=eps),
        out_shape=jax.ShapeDtypeStruct((Mp, H), _ACT_DTYPE),
        grid=(Mp // tm,),
        in_specs=[
            pl.BlockSpec((tm, H), lambda i: (i, 0)),
            pl.BlockSpec((1, H), lambda i: (0, 0)),
            pl.BlockSpec((1, H), lambda i: (0, 0)),
        ],
        out_specs=pl.BlockSpec((tm, H), lambda i: (i, 0)),
        compiler_params=_mosaic_params(("parallel",)),
    )(x, gamma.reshape(1, H), beta.reshape(1, H))
    return out[:M] if Mp != M else out


# -----------------------------------------------------------------------------
# Parameter construction (deterministic synthetic "pretrained" weights,
# already fused / relaid-out / bf16-cast at build time)
# -----------------------------------------------------------------------------
def make_params(key, vocab_size, max_pos, hidden, num_heads, intermediate,
                num_layers, pad_token_id, group_lanes=256):
    head_dim = hidden // num_heads
    g = _heads_per_group(num_heads, head_dim, group_lanes)
    ng = num_heads // g
    gdh = g * head_dim
    scale = 1.0 / math.sqrt(head_dim)

    keys = iter(jax.random.split(key, 8 + 16 * num_layers))

    def nrm(shape, s=0.02):
        return (s * jax.random.normal(next(keys), shape)).astype(jnp.float32)

    def bf(a):
        return a.astype(_ACT_DTYPE)

    params = {
        "config": dict(hidden_size=hidden, num_heads=num_heads,
                       head_dim=head_dim, heads_per_group=g, num_groups=ng,
                       group_width=gdh, pad_token_id=pad_token_id),
        "word_emb": bf(nrm((vocab_size, hidden))),
        "pos_emb": bf(nrm((max_pos, hidden))),
        "type_emb": bf(nrm((2, hidden))),
        "emb_ln_g": jnp.ones((hidden,), jnp.float32),
        "emb_ln_b": jnp.zeros((hidden,), jnp.float32),
        "det_w": nrm((1, hidden)),
        "det_b": jnp.zeros((1,), jnp.float32),
        "layers": [],
    }
    for _ in range(num_layers):
        wq, wk, wv = (nrm((hidden, hidden)) for _ in range(3))
        wo = nrm((hidden, hidden))
        bq = jnp.zeros((hidden,), jnp.float32)
        bk = jnp.zeros((hidden,), jnp.float32)
        bv = jnp.zeros((hidden,), jnp.float32)
        # One-time fusion + relayout: QKV concatenated with the 1/sqrt(Dh)
        # scale folded into the q part, head-grouped layouts for the kernels.
        wqkv = jnp.concatenate([wq * scale, wk, wv], axis=1)        # (H, 3H)
        bqkv = jnp.concatenate([bq * scale, bk, bv], axis=0)        # (3H,)
        params["layers"].append({
            "wqkv_g": bf(wqkv.reshape(hidden, 3 * ng, gdh).transpose(1, 0, 2)),
            "bqkv_g": bqkv.reshape(3 * ng, 1, gdh),
            "wo_g": bf(wo.reshape(ng, gdh, hidden)),
            "bo": jnp.zeros((hidden,), jnp.float32),
            "ln1_g": jnp.ones((hidden,), jnp.float32),
            "ln1_b": jnp.zeros((hidden,), jnp.float32),
            "w1": bf(nrm((hidden, intermediate))),
            "b1": jnp.zeros((intermediate,), jnp.float32),
            "w2": bf(nrm((intermediate, hidden))),
            "b2": jnp.zeros((hidden,), jnp.float32),
            "ln2_g": jnp.ones((hidden,), jnp.float32),
            "ln2_b": jnp.zeros((hidden,), jnp.float32),
        })
    return params


# -----------------------------------------------------------------------------
# Forward pass (embedding gathers are XLA glue; hot paths are Pallas kernels)
# -----------------------------------------------------------------------------
def electra_for_spelling_check(params, input_ids,
                               attention_mask=None, token_type_ids=None):
    # TODO(synk): labels/loss (bce/lsr/focal) branch not implemented; returns
    # logits exactly like the PyTorch module does when labels is None.
    cfg = params["config"]
    B, S = input_ids.shape
    H = cfg["hidden_size"]

    if attention_mask is None:
        attention_mask = jnp.where(input_ids == cfg["pad_token_id"], 0, 1)
    if token_type_ids is None:
        token_type_ids = jnp.zeros_like(input_ids)

    emb = (params["word_emb"][input_ids].astype(jnp.float32)
           + params["pos_emb"][jnp.arange(S)][None, :, :].astype(jnp.float32)
           + params["type_emb"][token_type_ids].astype(jnp.float32))
    x = layernorm(emb.reshape(B * S, H), params["emb_ln_g"],
                  params["emb_ln_b"])                               # bf16

    mask_bias = ((1.0 - attention_mask.astype(jnp.float32))
                 * -1e9).reshape(B, 1, S)

    logits = None
    n_layers = len(params["layers"])
    for li, layer in enumerate(params["layers"]):
        qkv = qkv_projection(x, layer["wqkv_g"], layer["bqkv_g"], B, S)
        x = attention_block(qkv, mask_bias, layer["wo_g"], layer["bo"],
                            x.reshape(B, S, H), layer["ln1_g"],
                            layer["ln1_b"], cfg).reshape(B * S, H)
        ffn = linear(x, layer["w1"], layer["b1"], activation="gelu")
        if li == n_layers - 1:
            x, logits = matmul_residual_layernorm(
                ffn, layer["w2"], layer["b2"], x, layer["ln2_g"],
                layer["ln2_b"], det_w=params["det_w"], det_b=params["det_b"])
        else:
            x = matmul_residual_layernorm(ffn, layer["w2"], layer["b2"], x,
                                          layer["ln2_g"], layer["ln2_b"])

    if logits is None:
        # TODO(synk): degenerate 0-encoder-layer config: detector in plain XLA.
        logits = (x.astype(jnp.float32) @ params["det_w"].reshape(H, 1)
                  + params["det_b"])

    return logits.reshape(B, S)


# -----------------------------------------------------------------------------
if __name__ == "__main__":
    VOCAB, MAX_POS = 100, 16
    HIDDEN, NUM_HEADS, INTERMEDIATE, NUM_LAYERS = 32, 4, 64, 2
    PAD_TOKEN_ID = 0
    B, S = 2, 8

    root = jax.random.PRNGKey(0)
    pkey, ikey = jax.random.split(root)
    params = make_params(pkey, VOCAB, MAX_POS, HIDDEN, NUM_HEADS,
                         INTERMEDIATE, NUM_LAYERS, PAD_TOKEN_ID)

    input_ids = jax.random.randint(ikey, (B, S), 1, VOCAB, dtype=jnp.int32)
    # introduce some pad tokens so the default attention_mask path is exercised
    input_ids = input_ids.at[0, -2:].set(PAD_TOKEN_ID)
    input_ids = input_ids.at[1, -1:].set(PAD_TOKEN_ID)

    logits = electra_for_spelling_check(params, input_ids)     # (B, S)
    logits = jax.block_until_ready(logits)
    assert logits.shape == (B, S) and logits.dtype == jnp.float32
    assert bool(jnp.all(jnp.isfinite(logits)))
    print("KERNEL_OK")
</pallas_src>

<mosaic_0001>
module attributes {stable_mosaic.version = 11 : i64} {
  func.func @_layernorm_kernel(%arg0: i32, %arg1: memref<16x32xf32, #tpu.memory_space<vmem>>, %arg2: memref<1x32xf32, #tpu.memory_space<vmem>>, %arg3: memref<1x32xf32, #tpu.memory_space<vmem>>, %arg4: memref<16x32xbf16, #tpu.memory_space<vmem>>) attributes {dimension_semantics = [#tpu.dimension_semantics<parallel>], iteration_bounds = array<i64: 1>, scalar_prefetch = 0 : i64, scratch_operands = 0 : i64, tpu.core_type = #tpu.core_type<tc>, window_params = [{transform_indices = @transform_0, window_bounds = array<i64: 16, 32>}, {pipeline_mode = #tpu.pipeline_mode<synchronous>, transform_indices = @transform_1, window_bounds = array<i64: 1, 32>}, {pipeline_mode = #tpu.pipeline_mode<synchronous>, transform_indices = @transform_2, window_bounds = array<i64: 1, 32>}, {transform_indices = @transform_3, window_bounds = array<i64: 16, 32>}]} {
    %c0 = arith.constant 0 : index
    %c0_0 = arith.constant 0 : index
    %0 = vector.load %arg1[%c0, %c0_0] : memref<16x32xf32, #tpu.memory_space<vmem>>, vector<16x32xf32>
    %cst = arith.constant dense<0.000000e+00> : vector<16xf32>
    %1 = vector.multi_reduction <add>, %0, %cst [1] : vector<16x32xf32> to vector<16xf32>
    %2 = vector.shape_cast %1 : vector<16xf32> to vector<16x1xf32>
    %cst_1 = arith.constant 3.200000e+01 : f32
    %3 = vector.broadcast %cst_1 : f32 to vector<16x1xf32>
    %4 = arith.divf %2, %3 : vector<16x1xf32>
    %5 = vector.broadcast %4 : vector<16x1xf32> to vector<16x32xf32>
    %6 = arith.subf %0, %5 : vector<16x32xf32>
    %7 = arith.mulf %6, %6 : vector<16x32xf32>
    %cst_2 = arith.constant dense<0.000000e+00> : vector<16xf32>
    %8 = vector.multi_reduction <add>, %7, %cst_2 [1] : vector<16x32xf32> to vector<16xf32>
    %9 = vector.shape_cast %8 : vector<16xf32> to vector<16x1xf32>
    %cst_3 = arith.constant 3.200000e+01 : f32
    %10 = vector.broadcast %cst_3 : f32 to vector<16x1xf32>
    %11 = arith.divf %9, %10 : vector<16x1xf32>
    %cst_4 = arith.constant 9.99999996E-13 : f32
    %12 = vector.broadcast %cst_4 : f32 to vector<16x1xf32>
    %13 = arith.addf %11, %12 : vector<16x1xf32>
    %14 = math.rsqrt %13 : vector<16x1xf32>
    %15 = vector.broadcast %14 : vector<16x1xf32> to vector<16x32xf32>
    %16 = arith.mulf %6, %15 : vector<16x32xf32>
    %c0_5 = arith.constant 0 : index
    %c0_6 = arith.constant 0 : index
    %17 = vector.load %arg2[%c0_5, %c0_6] : memref<1x32xf32, #tpu.memory_space<vmem>>, vector<1x32xf32>
    %18 = vector.broadcast %17 : vector<1x32xf32> to vector<16x32xf32>
    %19 = arith.mulf %16, %18 : vector<16x32xf32>
    %c0_7 = arith.constant 0 : index
    %c0_8 = arith.constant 0 : index
    %20 = vector.load %arg3[%c0_7, %c0_8] : memref<1x32xf32, #tpu.memory_space<vmem>>, vector<1x32xf32>
    %21 = vector.broadcast %20 : vector<1x32xf32> to vector<16x32xf32>
    %22 = arith.addf %19, %21 : vector<16x32xf32>
    %23 = arith.truncf %22 : vector<16x32xf32> to vector<16x32xbf16>
    %c0_9 = arith.constant 0 : index
    %c0_10 = arith.constant 0 : index
    %24 = vector.load %arg4[%c0_9, %c0_10] : memref<16x32xbf16, #tpu.memory_space<vmem>>, vector<16x32xbf16>
    tpu.vector_store %arg4[%c0_9, %c0_10], %23 {strides = array<i32>} : memref<16x32xbf16, #tpu.memory_space<vmem>>, vector<16x32xbf16>,
    return
  }
  func.func @transform_0(%arg0: i32) -> (i32, i32) {
    %c0_i32 = arith.constant 0 : i32
    %c0_i32_0 = arith.constant 0 : i32
    return %arg0, %c0_i32 : i32, i32
  }
  func.func @transform_1(%arg0: i32) -> (i32, i32) {
    %c0_i32 = arith.constant 0 : i32
    %c0_i32_0 = arith.constant 0 : i32
    %c0_i32_1 = arith.constant 0 : i32
    return %c0_i32, %c0_i32_0 : i32, i32
  }
  func.func @transform_2(%arg0: i32) -> (i32, i32) {
    %c0_i32 = arith.constant 0 : i32
    %c0_i32_0 = arith.constant 0 : i32
    %c0_i32_1 = arith.constant 0 : i32
    return %c0_i32, %c0_i32_0 : i32, i32
  }
  func.func @transform_3(%arg0: i32) -> (i32, i32) {
    %c0_i32 = arith.constant 0 : i32
    %c0_i32_0 = arith.constant 0 : i32
    return %arg0, %c0_i32 : i32, i32
  }
}

</mosaic_0001>

<llo_original>
// kernel: tpu_custom_call.1
$region0: #{tpu_custom_call.1}
  #allocation0 [shape = 'u32[]', space=smem, size = 0x4, offset = 0x4, fixed_abs, tag = 'smem constant byte address 0x4 - core index']
  #allocation1 [shape = 'u32[144,128]{1,0:T(1,128)}', space=vmem, size = 0x12000, scoped, tag = 'internal scratch']
  %s0 = inlined_call_operand.hbm [shape: f32[16,32], index: 0, kind: input, shape index: {}]
  %s1 = inlined_call_operand.hbm [shape: f32[1,32], index: 1, kind: input, shape index: {}]
  %s2 = inlined_call_operand.hbm [shape: f32[1,32], index: 2, kind: input, shape index: {}]
  %s3 = inlined_call_operand.hbm [shape: bf16[16,32], index: 3, kind: output, shape index: {}]
  %s4 = sld [smem:[#allocation0]]
  $region34: #{tpu_custom_call.1} parent=0
    _
  %s6 = ssub.s32 1, %s4
  %s7 = scalar_select 0, %s6, %s4
  $region1: #{tpu_custom_call.1} parent=0
    #allocation2 [shape = 'u8[8192]{0}', space=vmem, size = 0x2000, scoped, tag = 'input window, operand 0, single buffered']
    #allocation3 [shape = 's32[1]{0}', space=sflag, size = 0x4, scoped, tag = 'scoped memory for tpu_custom_call.1']
    #allocation4 [shape = 's32[1]{0}', space=sflag, size = 0x4, scoped, tag = 'scoped memory for tpu_custom_call.1']
    #allocation5 [shape = 'u8[512]{0}', space=vmem, size = 0x400, scoped, tag = 'input window, operand 1, single buffered']
    #allocation6 [shape = 's32[1]{0}', space=sflag, size = 0x4, scoped, tag = 'scoped memory for tpu_custom_call.1']
    #allocation7 [shape = 'u8[512]{0}', space=vmem, size = 0x400, scoped, tag = 'input window, operand 2, single buffered']
    #allocation8 [shape = 'u8[4096]{0}', space=vmem, size = 0x1000, scoped, tag = 'output window, operand 0, single buffered']
    %8 = vsyncpa [#allocation3], 0
    %9 = vsyncpa [#allocation6], 0
    %10 = vsyncpa [#allocation4], 0
    // Predicated region
    $region2: #{tpu_custom_call.1} parent=1 // pred_check
      _
    $region3: #{tpu_custom_call.1} parent=1 // pred_check_branch
      %12 = sbr.rel (0) target = $region5
    $region4: #{tpu_custom_call.1} parent=1 // pred_region
      %s14 = ssub.s32 256, 256
      %15 = vsyncadd [#allocation3], %s14
      %s16 = sshll.u32 [#allocation2], 4
      %s17 = int_to_ptr.vmem [resolvable:$true] %s16
      %22 = dma.hbm_to_vmem [thread:$0]  %s0, 256, %s17, [#allocation3], 128, 128, 8
    $region5: #{tpu_custom_call.1} parent=1 // pred_fallthru
      _
    // Predicated region
    $region6: #{tpu_custom_call.1} parent=1 // pred_check
      _
    $region7: #{tpu_custom_call.1} parent=1 // pred_check_branch
      %24 = sbr.rel (0) target = $region9
    $region8: #{tpu_custom_call.1} parent=1 // pred_region
      %s26 = ssub.s32 16, 16
      %27 = vsyncadd [#allocation6], %s26
      %s29 = sshll.u32 [#allocation5], 4
      %s30 = int_to_ptr.vmem [resolvable:$true] %s29
      %32 = dma.hbm_to_vmem [thread:$0]  %s1, 16, %s30, [#allocation6]
    $region9: #{tpu_custom_call.1} parent=1 // pred_fallthru
      _
    // Predicated region
    $region10: #{tpu_custom_call.1} parent=1 // pred_check
      _
    $region11: #{tpu_custom_call.1} parent=1 // pred_check_branch
      %34 = sbr.rel (0) target = $region13
    $region12: #{tpu_custom_call.1} parent=1 // pred_region
      %s36 = ssub.s32 16, 16
      %37 = vsyncadd [#allocation6], %s36
      %s39 = sshll.u32 [#allocation7], 4
      %s40 = int_to_ptr.vmem [resolvable:$true] %s39
      %42 = dma.hbm_to_vmem [thread:$0]  %s2, 16, %s40, [#allocation6]
    $region13: #{tpu_custom_call.1} parent=1 // pred_fallthru
      _
    // Predicated region
    $region14: #{tpu_custom_call.1} parent=1 // pred_check
      _
    $region15: #{tpu_custom_call.1} parent=1 // pred_check_branch
      %44 = sbr.rel (0) target = $region17
    $region16: #{tpu_custom_call.1} parent=1 // pred_region
      %45 = dma.done [#allocation3], 256
    $region17: #{tpu_custom_call.1} parent=1 // pred_fallthru
      _
    // Predicated region
    $region18: #{tpu_custom_call.1} parent=1 // pred_check
      _
    $region19: #{tpu_custom_call.1} parent=1 // pred_check_branch
      %47 = sbr.rel (0) target = $region21
    $region20: #{tpu_custom_call.1} parent=1 // pred_region
      %48 = dma.done [#allocation6], 16
    $region21: #{tpu_custom_call.1} parent=1 // pred_fallthru
      _
    // Predicated region
    $region22: #{tpu_custom_call.1} parent=1 // pred_check
      _
    $region23: #{tpu_custom_call.1} parent=1 // pred_check_branch
      %50 = sbr.rel (0) target = $region25
    $region24: #{tpu_custom_call.1} parent=1 // pred_region
      %51 = dma.done [#allocation6], 16
    $region25: #{tpu_custom_call.1} parent=1 // pred_fallthru
      _
    %v52 = vld [vmem:[#allocation2] sm:$0xff]
    %v53 = vld [vmem:[#allocation2 + $0x8] sm:$0xff]
    %vm54 = vcmask 261120
    %v55 = vsel %vm54, %v52, 0.0
    %56 = vadd.xlane.f32.xlu0 %v55
    %v57 = vpop.xlane.xlu0 %56
    %v58 = vsel %vm54, %v53, 0.0
    %59 = vadd.xlane.f32.xlu0 %v58
    %v60 = vpop.xlane.xlu0 %59
    %v61 = vrcp.pop 32.0
    %v62 = vmul.f32 %v57, %v61
    %v63 = vmul.f32 %v60, %v61
    %v64 = vsub.f32 %v52, %v62
    %v65 = vsub.f32 %v53, %v63
    %v66 = vmul.f32 %v64, %v64
    %v67 = vmul.f32 %v65, %v65
    %v68 = vsel %vm54, %v66, 0.0
    %69 = vadd.xlane.f32.xlu0 %v68
    %v70 = vpop.xlane.xlu0 %69
    %v71 = vsel %vm54, %v67, 0.0
    %72 = vadd.xlane.f32.xlu0 %v71
    %v73 = vpop.xlane.xlu0 %72
    %v74 = vmul.f32 %v70, %v61
    %v75 = vmul.f32 %v73, %v61
    %v76 = vadd.f32 %v74, 1e-12
    %v77 = vadd.f32 %v75, 1e-12
    %v78 = vrsqrt.pop %v76
    %v79 = vrsqrt.pop %v77
    %v80 = vmul.f32 %v64, %v78
    %v81 = vmul.f32 %v65, %v79
    %v82 = vld [vmem:[#allocation5] sm:$0x1]
    %v84 = vlaneseq
    %v85 = vshrl.u32 %v84, 7
    %v86 = vsub.s32 0, %v85
    %v87 = vrot.slane %v82, %v86
    %v89 = vmul.f32 %v80, %v87
    %v90 = vmul.f32 %v81, %v87
    %v91 = vld [vmem:[#allocation7] sm:$0x1]
    %v93 = vlaneseq
    %v94 = vshrl.u32 %v93, 7
    %v95 = vsub.s32 0, %v94
    %v96 = vrot.slane %v91, %v95
    %v98 = vadd.f32 %v89, %v96
    %v99 = vadd.f32 %v90, %v96
    %v100 = vpack.c.bf16 %v99, %v98
    %v102 = vunpack.c.l.b16 %v100
    %v103 = vunpack.c.h.b16 %v100
    %v104 = vpack.c.b16 %v102, %v102
    %v105 = vpack.c.b16 %v103, %v103
    %vm108 = vcmask 257024
    %109 = vst.msk [vmem:[#allocation8] sm:$0xf] %vm108, %v104
    %110 = vst.msk [vmem:[#allocation8 + $0x4] sm:$0xf] %vm108, %v105
    // Predicated region
    $region26: #{tpu_custom_call.1} parent=1 // pred_check
      _
    $region27: #{tpu_custom_call.1} parent=1 // pred_check_branch
      %112 = sbr.rel (0) target = $region29
    $region28: #{tpu_custom_call.1} parent=1 // pred_region
      %s114 = ssub.s32 128, 128
      %115 = vsyncadd [#allocation4], %s114
      %s116 = sshll.u32 [#allocation8], 4
      %s117 = int_to_ptr.vmem [resolvable:$true] %s116
      %122 = dma.vmem_to_hbm [thread:$0]  %s117, 128, %s3, [#allocation4], 64, 64, 4
    $region29: #{tpu_custom_call.1} parent=1 // pred_fallthru
      _
    // Predicated region
    $region30: #{tpu_custom_call.1} parent=1 // pred_check
      _
    $region31: #{tpu_custom_call.1} parent=1 // pred_check_branch
      %124 = sbr.rel (0) target = $region33
    $region32: #{tpu_custom_call.1} parent=1 // pred_region
      %125 = dma.done [#allocation4], 128
    $region33: #{tpu_custom_call.1} parent=1 // pred_fallthru
      _
    %126 = vsyncpa [#allocation3], 1
    %127 = vsyncpa [#allocation6], 1
    %128 = vsyncpa [#allocation4], 1

</llo_original>
